<compile_context>
chip_gen: v5e
topology: v5e:2x2
jax: 0.10.0
libtpu: 0.0.40
codegen_flags: <defaults>
</compile_context>

<pallas_src>
import math

import jax
import jax.numpy as jnp
from jax.experimental import pallas as pl
from jax.experimental.pallas import tpu as pltpu

_LANE = 128
_SUBLANE = 8
_TB_TARGET = 2048  # rows per grid step for large B (amortizes per-step cost)


def _round_up(x, m):
    return (x + m - 1) // m * m


def _tile_rows(B):
    """Batch tile: multiple of 8, >=2 grid steps when B > 8 (v7x 2-TC), capped."""
    if B <= _SUBLANE:
        return B  # single block equal to the full dim (satisfies (8,128) rule)
    return min(_TB_TARGET, _round_up(pl.cdiv(B, 2), _SUBLANE))


# --------------------------------- kernels ----------------------------------

def _mlp_kernel(z_ref, w1z_ref, b1_ref, w2_ref, b2_ref, out_ref):
    """out = relu(z @ W1z + b1) @ W2 + b2   (b1 already folded with a @ W1a)."""
    h = jnp.dot(z_ref[...], w1z_ref[...], preferred_element_type=jnp.float32)
    h = jnp.maximum(h + b1_ref[...], 0.0)
    o = jnp.dot(h, w2_ref[...], preferred_element_type=jnp.float32)
    out_ref[...] = (o + b2_ref[...]).astype(out_ref.dtype)


def _mlp_kernel_batched_a(z_ref, a_ref, w1z_ref, w1a_ref, b1_ref, w2_ref,
                          b2_ref, out_ref):
    """out = relu(z @ W1z + a @ W1a + b1) @ W2 + b2   (per-row a)."""
    h = jnp.dot(z_ref[...], w1z_ref[...], preferred_element_type=jnp.float32)
    h = h + jnp.dot(a_ref[...], w1a_ref[...], preferred_element_type=jnp.float32)
    h = jnp.maximum(h + b1_ref[...], 0.0)
    o = jnp.dot(h, w2_ref[...], preferred_element_type=jnp.float32)
    out_ref[...] = (o + b2_ref[...]).astype(out_ref.dtype)


# -------------------------------- wrappers -----------------------------------

def _resident(shape):
    # Same block every grid step -> stays VMEM-resident across the grid.
    return pl.BlockSpec(shape, lambda i: (0, 0))


def _compiler_params():
    return pltpu.CompilerParams(
        dimension_semantics=("parallel",),   # batch-parallel (v7x 2-TC sharding)
        vmem_limit_bytes=32 * 1024 * 1024,   # safe on v5e/v6e/v7x; footprint ~1 MiB
    )


@jax.jit
def _run_mlp_batched_a(z, a, w1z, w1a, b1, w2, b2):
    B, n_in = z.shape
    n_act = a.shape[1]
    n_out = w2.shape[1]
    TB = _tile_rows(B)
    return pl.pallas_call(
        _mlp_kernel_batched_a,
        out_shape=jax.ShapeDtypeStruct((B, n_out), jnp.float32),
        grid=(pl.cdiv(B, TB),),              # ragged last block handled by Pallas
        in_specs=[
            pl.BlockSpec((TB, n_in), lambda i: (i, 0)),
            pl.BlockSpec((TB, n_act), lambda i: (i, 0)),
            _resident(w1z.shape),
            _resident(w1a.shape),
            _resident(b1.shape),
            _resident(w2.shape),
            _resident(b2.shape),
        ],
        out_specs=pl.BlockSpec((TB, n_out), lambda i: (i, 0)),
        compiler_params=_compiler_params(),
    )(z, a, w1z, w1a, b1, w2, b2)


@jax.jit
def _run_mlp_bcast_a(z, a_row, w1z, w1a, b1, w2, b2):
    # Fold the broadcast action's contribution into the bias once (tiny XLA op)
    # so the kernel streams only z and writes only out.
    b1_eff = jnp.dot(a_row, w1a, preferred_element_type=jnp.float32) + b1
    B, n_in = z.shape
    n_out = w2.shape[1]
    TB = _tile_rows(B)
    return pl.pallas_call(
        _mlp_kernel,
        out_shape=jax.ShapeDtypeStruct((B, n_out), jnp.float32),
        grid=(pl.cdiv(B, TB),),
        in_specs=[
            pl.BlockSpec((TB, n_in), lambda i: (i, 0)),
            _resident(w1z.shape),
            _resident(b1_eff.shape),
            _resident(w2.shape),
            _resident(b2.shape),
        ],
        out_specs=pl.BlockSpec((TB, n_out), lambda i: (i, 0)),
        compiler_params=_compiler_params(),
    )(z, w1z, b1_eff, w2, b2)


# ----------------------------- params / forward ------------------------------

def init_action_encoder_params(key, n_dim, n_actions, hidden_dim):
    """torch.nn.Linear-style init: U(-1/sqrt(fan_in), 1/sqrt(fan_in)), f32."""
    k1, k2, k3, k4 = jax.random.split(key, 4)
    fan1 = n_dim + n_actions
    fan2 = hidden_dim
    bd1 = 1.0 / math.sqrt(fan1)
    bd2 = 1.0 / math.sqrt(fan2)
    # Stored [in, out] (transposed from PyTorch's [out, in]).
    w1 = jax.random.uniform(k1, (fan1, hidden_dim), jnp.float32, -bd1, bd1)
    b1 = jax.random.uniform(k2, (1, hidden_dim), jnp.float32, -bd1, bd1)
    w2 = jax.random.uniform(k3, (hidden_dim, n_dim), jnp.float32, -bd2, bd2)
    b2 = jax.random.uniform(k4, (1, n_dim), jnp.float32, -bd2, bd2)
    return {"w1": w1, "b1": b1, "w2": w2, "b2": b2}


def pack_params_for_kernel(params, n_dim, n_actions, hidden_dim):
    """Split W1 (fuses concat); pad only the hidden dim to 128 lanes (f32)."""
    Hp = _round_up(hidden_dim, _LANE)
    w1, b1, w2, b2 = params["w1"], params["b1"], params["w2"], params["b2"]
    pad_h = Hp - hidden_dim
    w1z = jnp.pad(w1[:n_dim], ((0, 0), (0, pad_h)))
    w1a = jnp.pad(w1[n_dim:], ((0, 0), (0, pad_h)))
    b1p = jnp.pad(b1, ((0, 0), (0, pad_h)))
    w2p = jnp.pad(w2, ((0, pad_h), (0, 0)))          # output dim stays = n_dim
    return {"w1z": w1z, "w1a": w1a, "b1": b1p, "w2": w2p, "b2": b2,
            "n_dim": n_dim}


def action_encoder_forward(z, a, kparams):
    """Matches ActionEncoder.forward(z, a)."""
    if z.ndim == 3:
        # TODO(synk): assumes the leading axis is exactly 1 (torch contract).
        z = jnp.squeeze(z, axis=0)
        a_row = a if a.ndim == 2 else a[None, :]
        return _run_mlp_bcast_a(z, a_row, kparams["w1z"], kparams["w1a"],
                                kparams["b1"], kparams["w2"], kparams["b2"])
    return _run_mlp_batched_a(z, a, kparams["w1z"], kparams["w1a"],
                              kparams["b1"], kparams["w2"], kparams["b2"])


# ----------------------------- reference (f32) --------------------------------

def _reference_f32(z, a, params):
    if z.ndim == 3:
        z = jnp.squeeze(z, axis=0)
        a = jnp.tile(a if a.ndim == 2 else a[None, :], (z.shape[0], 1))
    za = jnp.concatenate([z, a], axis=1)
    h = jnp.maximum(za @ params["w1"] + params["b1"], 0.0)
    return h @ params["w2"] + params["b2"]


if __name__ == "__main__":
    batch, n_dim, n_actions, hidden_dim = 8, 32, 8, 64

    key = jax.random.PRNGKey(0)
    kp, kz, ka, kz3, ka3, kz4, ka4 = jax.random.split(key, 7)
    params = init_action_encoder_params(kp, n_dim, n_actions, hidden_dim)
    kparams = pack_params_for_kernel(params, n_dim, n_actions, hidden_dim)

    tol = dict(atol=2e-2, rtol=2e-2)  # covers default-precision matmul modes

    # 2-D path: z [B, n_dim], a [B, n_actions]
    z = jax.random.normal(kz, (batch, n_dim), jnp.float32)
    a = jax.random.normal(ka, (batch, n_actions), jnp.float32)
    out = jax.block_until_ready(action_encoder_forward(z, a, kparams))
    assert out.shape == (batch, n_dim)
    assert jnp.allclose(out, _reference_f32(z, a, params), **tol)

    # 3-D path: z [1, B, n_dim], a [1, n_actions] (a broadcast over batch)
    z3 = jax.random.normal(kz3, (1, batch, n_dim), jnp.float32)
    a3 = jax.random.normal(ka3, (1, n_actions), jnp.float32)
    out3 = jax.block_until_ready(action_encoder_forward(z3, a3, kparams))
    assert out3.shape == (batch, n_dim)
    assert jnp.allclose(out3, _reference_f32(z3, a3, params), **tol)

    # Ragged batch (B not a multiple of the 8-row tile): exercises masked block.
    br = 10
    zr = jax.random.normal(kz4, (br, n_dim), jnp.float32)
    ar = jax.random.normal(ka4, (br, n_actions), jnp.float32)
    outr = jax.block_until_ready(action_encoder_forward(zr, ar, kparams))
    assert outr.shape == (br, n_dim)
    assert jnp.allclose(outr, _reference_f32(zr, ar, params), **tol)

    print("KERNEL_OK")
</pallas_src>

<mosaic_0001>
module attributes {stable_mosaic.version = 11 : i64} {
  func.func @_mlp_kernel_batched_a(%arg0: i32, %arg1: memref<8x32xf32, #tpu.memory_space<vmem>>, %arg2: memref<8x8xf32, #tpu.memory_space<vmem>>, %arg3: memref<32x128xf32, #tpu.memory_space<vmem>>, %arg4: memref<8x128xf32, #tpu.memory_space<vmem>>, %arg5: memref<1x128xf32, #tpu.memory_space<vmem>>, %arg6: memref<128x32xf32, #tpu.memory_space<vmem>>, %arg7: memref<1x32xf32, #tpu.memory_space<vmem>>, %arg8: memref<8x32xf32, #tpu.memory_space<vmem>>) attributes {dimension_semantics = [#tpu.dimension_semantics<parallel>], iteration_bounds = array<i64: 1>, scalar_prefetch = 0 : i64, scratch_operands = 0 : i64, tpu.core_type = #tpu.core_type<tc>, window_params = [{transform_indices = @transform_0, window_bounds = array<i64: 8, 32>}, {transform_indices = @transform_1, window_bounds = array<i64: 8, 8>}, {pipeline_mode = #tpu.pipeline_mode<synchronous>, transform_indices = @transform_2, window_bounds = array<i64: 32, 128>}, {pipeline_mode = #tpu.pipeline_mode<synchronous>, transform_indices = @transform_3, window_bounds = array<i64: 8, 128>}, {pipeline_mode = #tpu.pipeline_mode<synchronous>, transform_indices = @transform_4, window_bounds = array<i64: 1, 128>}, {pipeline_mode = #tpu.pipeline_mode<synchronous>, transform_indices = @transform_5, window_bounds = array<i64: 128, 32>}, {pipeline_mode = #tpu.pipeline_mode<synchronous>, transform_indices = @transform_6, window_bounds = array<i64: 1, 32>}, {transform_indices = @transform_7, window_bounds = array<i64: 8, 32>}]} {
    %c0 = arith.constant 0 : index
    %c0_0 = arith.constant 0 : index
    %0 = vector.load %arg1[%c0, %c0_0] : memref<8x32xf32, #tpu.memory_space<vmem>>, vector<8x32xf32>
    %c0_1 = arith.constant 0 : index
    %c0_2 = arith.constant 0 : index
    %1 = vector.load %arg3[%c0_1, %c0_2] : memref<32x128xf32, #tpu.memory_space<vmem>>, vector<32x128xf32>
    %cst = arith.constant dense<0.000000e+00> : vector<8x128xf32>
    %2 = tpu.matmul %0, %1, %cst {dimension_numbers = #tpu.dot_dimension_numbers<[1], [0], [0], [1], [0, 0, 1, 1], [], []>} : vector<8x32xf32>, vector<32x128xf32>, vector<8x128xf32> -> vector<8x128xf32>
    %c0_3 = arith.constant 0 : index
    %c0_4 = arith.constant 0 : index
    %3 = vector.load %arg2[%c0_3, %c0_4] : memref<8x8xf32, #tpu.memory_space<vmem>>, vector<8x8xf32>
    %c0_5 = arith.constant 0 : index
    %c0_6 = arith.constant 0 : index
    %4 = vector.load %arg4[%c0_5, %c0_6] : memref<8x128xf32, #tpu.memory_space<vmem>>, vector<8x128xf32>
    %cst_7 = arith.constant dense<0.000000e+00> : vector<8x128xf32>
    %5 = tpu.matmul %3, %4, %cst_7 {dimension_numbers = #tpu.dot_dimension_numbers<[1], [0], [0], [1], [0, 0, 1, 1], [], []>} : vector<8x8xf32>, vector<8x128xf32>, vector<8x128xf32> -> vector<8x128xf32>
    %6 = arith.addf %2, %5 : vector<8x128xf32>
    %c0_8 = arith.constant 0 : index
    %c0_9 = arith.constant 0 : index
    %7 = vector.load %arg5[%c0_8, %c0_9] : memref<1x128xf32, #tpu.memory_space<vmem>>, vector<1x128xf32>
    %8 = vector.broadcast %7 : vector<1x128xf32> to vector<8x128xf32>
    %9 = arith.addf %6, %8 : vector<8x128xf32>
    %cst_10 = arith.constant 0.000000e+00 : f32
    %10 = vector.broadcast %cst_10 : f32 to vector<8x128xf32>
    %11 = arith.maximumf %9, %10 : vector<8x128xf32>
    %c0_11 = arith.constant 0 : index
    %c0_12 = arith.constant 0 : index
    %12 = vector.load %arg6[%c0_11, %c0_12] : memref<128x32xf32, #tpu.memory_space<vmem>>, vector<128x32xf32>
    %cst_13 = arith.constant dense<0.000000e+00> : vector<8x32xf32>
    %13 = tpu.matmul %11, %12, %cst_13 {dimension_numbers = #tpu.dot_dimension_numbers<[1], [0], [0], [1], [0, 0, 1, 1], [], []>} : vector<8x128xf32>, vector<128x32xf32>, vector<8x32xf32> -> vector<8x32xf32>
    %c0_14 = arith.constant 0 : index
    %c0_15 = arith.constant 0 : index
    %14 = vector.load %arg7[%c0_14, %c0_15] : memref<1x32xf32, #tpu.memory_space<vmem>>, vector<1x32xf32>
    %15 = vector.broadcast %14 : vector<1x32xf32> to vector<8x32xf32>
    %16 = arith.addf %13, %15 : vector<8x32xf32>
    %c0_16 = arith.constant 0 : index
    %c0_17 = arith.constant 0 : index
    %17 = vector.load %arg8[%c0_16, %c0_17] : memref<8x32xf32, #tpu.memory_space<vmem>>, vector<8x32xf32>
    tpu.vector_store %arg8[%c0_16, %c0_17], %16 {strides = array<i32>} : memref<8x32xf32, #tpu.memory_space<vmem>>, vector<8x32xf32>,
    return
  }
  func.func @transform_0(%arg0: i32) -> (i32, i32) {
    %c0_i32 = arith.constant 0 : i32
    %c0_i32_0 = arith.constant 0 : i32
    return %arg0, %c0_i32 : i32, i32
  }
  func.func @transform_1(%arg0: i32) -> (i32, i32) {
    %c0_i32 = arith.constant 0 : i32
    %c0_i32_0 = arith.constant 0 : i32
    return %arg0, %c0_i32 : i32, i32
  }
  func.func @transform_2(%arg0: i32) -> (i32, i32) {
    %c0_i32 = arith.constant 0 : i32
    %c0_i32_0 = arith.constant 0 : i32
    %c0_i32_1 = arith.constant 0 : i32
    return %c0_i32, %c0_i32_0 : i32, i32
  }
  func.func @transform_3(%arg0: i32) -> (i32, i32) {
    %c0_i32 = arith.constant 0 : i32
    %c0_i32_0 = arith.constant 0 : i32
    %c0_i32_1 = arith.constant 0 : i32
    return %c0_i32, %c0_i32_0 : i32, i32
  }
  func.func @transform_4(%arg0: i32) -> (i32, i32) {
    %c0_i32 = arith.constant 0 : i32
    %c0_i32_0 = arith.constant 0 : i32
    %c0_i32_1 = arith.constant 0 : i32
    return %c0_i32, %c0_i32_0 : i32, i32
  }
  func.func @transform_5(%arg0: i32) -> (i32, i32) {
    %c0_i32 = arith.constant 0 : i32
    %c0_i32_0 = arith.constant 0 : i32
    %c0_i32_1 = arith.constant 0 : i32
    return %c0_i32, %c0_i32_0 : i32, i32
  }
  func.func @transform_6(%arg0: i32) -> (i32, i32) {
    %c0_i32 = arith.constant 0 : i32
    %c0_i32_0 = arith.constant 0 : i32
    %c0_i32_1 = arith.constant 0 : i32
    return %c0_i32, %c0_i32_0 : i32, i32
  }
  func.func @transform_7(%arg0: i32) -> (i32, i32) {
    %c0_i32 = arith.constant 0 : i32
    %c0_i32_0 = arith.constant 0 : i32
    return %arg0, %c0_i32 : i32, i32
  }
}

</mosaic_0001>

<llo_original>
// kernel: _run_mlp_batched_a.1
$region0: #{_run_mlp_batched_a.1}
  #allocation0 [shape = 'u32[]', space=smem, size = 0x4, offset = 0x4, fixed_abs, tag = 'smem constant byte address 0x4 - core index']
  #allocation1 [shape = 'u32[72,128]{1,0:T(1,128)}', space=vmem, size = 0x9000, scoped, tag = 'internal scratch']
  %s0 = inlined_call_operand.vmem [shape: f32[8,32], index: 0, kind: input, shape index: {}]
  %s1 = inlined_call_operand.vmem [shape: f32[8,8], index: 1, kind: input, shape index: {}]
  %s2 = inlined_call_operand.vmem [shape: f32[32,128], index: 2, kind: input, shape index: {}]
  %s3 = inlined_call_operand.vmem [shape: f32[8,128], index: 3, kind: input, shape index: {}]
  %s4 = inlined_call_operand.vmem [shape: f32[1,128], index: 4, kind: input, shape index: {}]
  %s5 = inlined_call_operand.vmem [shape: f32[128,32], index: 5, kind: input, shape index: {}]
  %s6 = inlined_call_operand.vmem [shape: f32[1,32], index: 6, kind: input, shape index: {}]
  %s7 = inlined_call_operand.hbm [shape: f32[8,32], index: 7, kind: output, shape index: {}]
  %s8 = sld [smem:[#allocation0]]
  $region38: #{_run_mlp_batched_a.1} parent=0
    _
  %s10 = ssub.s32 1, %s8
  %s11 = scalar_select 0, %s10, %s8
  $region1: #{_run_mlp_batched_a.1} parent=0
    #allocation2 [shape = 'u8[4096]{0}', space=vmem, size = 0x1000, scoped, tag = 'output window, operand 0, single buffered']
    #allocation3 [shape = 's32[1]{0}', space=sflag, size = 0x4, scoped, tag = 'scoped memory for _run_mlp_batched_a.1']
    %12 = vsyncpa [#allocation3], 0
    // Predicated region
    $region2: #{_run_mlp_batched_a.1} parent=1 // pred_check
      _
    $region3: #{_run_mlp_batched_a.1} parent=1 // pred_check_branch
      %14 = sbr.rel (0) target = $region5
    $region4: #{_run_mlp_batched_a.1} parent=1 // pred_region
      _
    $region5: #{_run_mlp_batched_a.1} parent=1 // pred_fallthru
      _
    // Predicated region
    $region6: #{_run_mlp_batched_a.1} parent=1 // pred_check
      _
    $region7: #{_run_mlp_batched_a.1} parent=1 // pred_check_branch
      %16 = sbr.rel (0) target = $region9
    $region8: #{_run_mlp_batched_a.1} parent=1 // pred_region
      _
    $region9: #{_run_mlp_batched_a.1} parent=1 // pred_fallthru
      _
    // Predicated region
    $region10: #{_run_mlp_batched_a.1} parent=1 // pred_check
      _
    $region11: #{_run_mlp_batched_a.1} parent=1 // pred_check_branch
      %18 = sbr.rel (0) target = $region13
    $region12: #{_run_mlp_batched_a.1} parent=1 // pred_region
      _
    $region13: #{_run_mlp_batched_a.1} parent=1 // pred_fallthru
      _
    // Predicated region
    $region14: #{_run_mlp_batched_a.1} parent=1 // pred_check
      _
    $region15: #{_run_mlp_batched_a.1} parent=1 // pred_check_branch
      %20 = sbr.rel (0) target = $region17
    $region16: #{_run_mlp_batched_a.1} parent=1 // pred_region
      _
    $region17: #{_run_mlp_batched_a.1} parent=1 // pred_fallthru
      _
    // Predicated region
    $region18: #{_run_mlp_batched_a.1} parent=1 // pred_check
      _
    $region19: #{_run_mlp_batched_a.1} parent=1 // pred_check_branch
      %22 = sbr.rel (0) target = $region21
    $region20: #{_run_mlp_batched_a.1} parent=1 // pred_region
      _
    $region21: #{_run_mlp_batched_a.1} parent=1 // pred_fallthru
      _
    // Predicated region
    $region22: #{_run_mlp_batched_a.1} parent=1 // pred_check
      _
    $region23: #{_run_mlp_batched_a.1} parent=1 // pred_check_branch
      %24 = sbr.rel (0) target = $region25
    $region24: #{_run_mlp_batched_a.1} parent=1 // pred_region
      _
    $region25: #{_run_mlp_batched_a.1} parent=1 // pred_fallthru
      _
    // Predicated region
    $region26: #{_run_mlp_batched_a.1} parent=1 // pred_check
      _
    $region27: #{_run_mlp_batched_a.1} parent=1 // pred_check_branch
      %26 = sbr.rel (0) target = $region29
    $region28: #{_run_mlp_batched_a.1} parent=1 // pred_region
      _
    $region29: #{_run_mlp_batched_a.1} parent=1 // pred_fallthru
      _
    %v27 = vld [vmem:[%s0] sm:$0xff]
    %v28 = vld [vmem:[%s2] sm:$0xff]
    %v29 = vld [vmem:[%s2 + $0x8] sm:$0xff]
    %v30 = vld [vmem:[%s2 + $0x10] sm:$0xff]
    %v31 = vld [vmem:[%s2 + $0x18] sm:$0xff]
    %v32 = vld [vmem:[%s1] sm:$0xff]
    %v33 = vld [vmem:[%s3] sm:$0xff]
    %vm34 = vcmask 64512
    %v36 = vsel %vm34, %v32, 0
    %38 = vmatpush.msra.mxu0 0.0
    %39 = vmatpush.msra.mxu0 0.0
    %40 = vmatpush.msra.mxu0 0.0
    %41 = vmatpush.msra.mxu0 0.0
    %42 = vmatpush.msra.mxu0 0.0
    %43 = vmatpush.msra.mxu0 0.0
    %44 = vmatpush.msra.mxu0 0.0
    %45 = vmatpush.msra.mxu0 0.0
    %46 = vmatpush.msra.mxu0 0.0
    %47 = vmatpush.msra.mxu0 0.0
    %48 = vmatpush.msra.mxu0 0.0
    %49 = vmatpush.msra.mxu0 0.0
    %50 = vmatpush.msra.mxu0 0.0
    %51 = vmatpush.msra.mxu0 0.0
    %52 = vmatpush.msra.mxu0 0.0
    %53 = vmatpush.msra.mxu0 %v33
    %54 = vmatmul.f32.gmra.mxu0 %v36
    %v55 = vpop.f32.mrf.mxu0
    %v56 = vadd.f32 0.0, %v55
    %57 = vdwg.mxu0
    %vm58 = vcmask 261120
    %v60 = vsel %vm58, %v27, 0
    %62 = vmatpush.msra.mxu0 0.0
    %63 = vmatpush.msra.mxu0 0.0
    %64 = vmatpush.msra.mxu0 0.0
    %65 = vmatpush.msra.mxu0 0.0
    %66 = vmatpush.msra.mxu0 0.0
    %67 = vmatpush.msra.mxu0 0.0
    %68 = vmatpush.msra.mxu0 0.0
    %69 = vmatpush.msra.mxu0 0.0
    %70 = vmatpush.msra.mxu0 0.0
    %71 = vmatpush.msra.mxu0 0.0
    %72 = vmatpush.msra.mxu0 0.0
    %73 = vmatpush.msra.mxu0 0.0
    %74 = vmatpush.msra.mxu0 %v31
    %75 = vmatpush.msra.mxu0 %v30
    %76 = vmatpush.msra.mxu0 %v29
    %77 = vmatpush.msra.mxu0 %v28
    %78 = vmatmul.f32.gmra.mxu0 %v60
    %v79 = vpop.f32.mrf.mxu0
    %v80 = vadd.f32 %v56, %v79
    %81 = vdwg.mxu0
    %v82 = vld [vmem:[%s4] sm:$0x1]
    %v84 = vperm.slane %v82, 0
    %v86 = vadd.f32 %v80, %v84
    %v87 = vmax.f32 %v86, 0.0
    %v88 = vld [vmem:[%s5] sm:$0xff]
    %v89 = vld [vmem:[%s5 + $0x8] sm:$0xff]
    %v90 = vld [vmem:[%s5 + $0x10] sm:$0xff]
    %v91 = vld [vmem:[%s5 + $0x18] sm:$0xff]
    %v92 = vld [vmem:[%s5 + $0x20] sm:$0xff]
    %v93 = vld [vmem:[%s5 + $0x28] sm:$0xff]
    %v94 = vld [vmem:[%s5 + $0x30] sm:$0xff]
    %v95 = vld [vmem:[%s5 + $0x38] sm:$0xff]
    %v96 = vld [vmem:[%s5 + $0x40] sm:$0xff]
    %v97 = vld [vmem:[%s5 + $0x48] sm:$0xff]
    %v98 = vld [vmem:[%s5 + $0x50] sm:$0xff]
    %v99 = vld [vmem:[%s5 + $0x58] sm:$0xff]
    %v100 = vld [vmem:[%s5 + $0x60] sm:$0xff]
    %v101 = vld [vmem:[%s5 + $0x68] sm:$0xff]
    %v102 = vld [vmem:[%s5 + $0x70] sm:$0xff]
    %v103 = vld [vmem:[%s5 + $0x78] sm:$0xff]
    %v104 = vld [vmem:[%s6] sm:$0x1]
    %v106 = vperm.slane %v104, 0
    %108 = vmatpush.msra.mxu0 %v103
    %109 = vmatpush.msra.mxu0 %v102
    %110 = vmatpush.msra.mxu0 %v101
    %111 = vmatpush.msra.mxu0 %v100
    %112 = vmatpush.msra.mxu0 %v99
    %113 = vmatpush.msra.mxu0 %v98
    %114 = vmatpush.msra.mxu0 %v97
    %115 = vmatpush.msra.mxu0 %v96
    %116 = vmatpush.msra.mxu0 %v95
    %117 = vmatpush.msra.mxu0 %v94
    %118 = vmatpush.msra.mxu0 %v93
    %119 = vmatpush.msra.mxu0 %v92
    %120 = vmatpush.msra.mxu0 %v91
    %121 = vmatpush.msra.mxu0 %v90
    %122 = vmatpush.msra.mxu0 %v89
    %123 = vmatpush.msra.mxu0 %v88
    %124 = vmatmul.f32.gmra.mxu0 %v87
    %v125 = vpop.f32.mrf.mxu0
    %v126 = vadd.f32 %v106, %v125
    %127 = vdwg.mxu0
    %128 = vst.msk [vmem:[#allocation2] sm:$0xff] %vm58, %v126
    // Predicated region
    $region30: #{_run_mlp_batched_a.1} parent=1 // pred_check
      _
    $region31: #{_run_mlp_batched_a.1} parent=1 // pred_check_branch
      %130 = sbr.rel (0) target = $region33
    $region32: #{_run_mlp_batched_a.1} parent=1 // pred_region
      %132 = vsyncadd [#allocation3], 0
      %s134 = sshll.u32 [#allocation2], 4
      %s135 = int_to_ptr.vmem [resolvable:$true] %s134
      %s136 = sshll.u32 %s7, 4
      %s137 = int_to_ptr.hbm [resolvable:$true] %s136
      %139 = dma.vmem_to_hbm [thread:$0]  %s135, 128, %s137, [#allocation3]
    $region33: #{_run_mlp_batched_a.1} parent=1 // pred_fallthru
      _
    // Predicated region
    $region34: #{_run_mlp_batched_a.1} parent=1 // pred_check
      _
    $region35: #{_run_mlp_batched_a.1} parent=1 // pred_check_branch
      %141 = sbr.rel (0) target = $region37
    $region36: #{_run_mlp_batched_a.1} parent=1 // pred_region
      %143 = dma.done [#allocation3], 128
    $region37: #{_run_mlp_batched_a.1} parent=1 // pred_fallthru
      _
    %144 = vsyncpa [#allocation3], 1

</llo_original>
